<compile_context>
chip_gen: v7x
topology: tpu7x:2x2x1
jax: 0.10.0
libtpu: 0.0.40
codegen_flags: <defaults>
</compile_context>

<pallas_src>
import jax
import jax.numpy as jnp
from jax.experimental import pallas as pl
from jax.experimental.pallas import tpu as pltpu

_PACK = 8  # batch rows packed per lane-dense row (sublane count of an f32 vreg)


def _round_up(a: int, m: int) -> int:
    return ((a + m - 1) // m) * m


def _fused_linear_kernel(xp_ref, wp_ref, bt_ref, op_ref):
    # xp_ref: (tile_rows, PACK*K)   8 batch rows packed per row (lane-dense)
    # wp_ref: (PACK*K, PACK*N)      block-diagonal packed weight
    # bt_ref: (1, PACK*N)           (bias + t0) tiled PACK times
    # op_ref: (tile_rows, PACK*N)   packed output
    y = jnp.dot(xp_ref[...], wp_ref[...], preferred_element_type=jnp.float32)
    y = y + bt_ref[...]
    op_ref[...] = jnp.maximum(y, 0.0).astype(op_ref.dtype)


def linear_add_relu(x, weight, bias, t0, *,
                    max_tile_rows=2048, min_pallas_batch=512):
    """Fused relu(x @ weight.T + bias + t0).

    x: (B, K), weight: (N, K) (native nn.Linear layout), bias: (N,), t0: (N,).
    Returns (B, N).
    """
    B, K = x.shape
    N = weight.shape[0]
    P = _PACK

    bt = (bias + t0).astype(jnp.float32)

    # Tiny batches: a single fused XLA expression beats any custom-call launch.
    if B < min_pallas_batch:
        return jnp.maximum(x @ weight.T + bt, 0.0).astype(x.dtype)

    # --- pack operands so loads and the MXU feed are lane dense -------------
    # Block-diagonal weight: Wp[K*j + k, N*j + n] = weight[n, k]
    eyeP = jnp.eye(P, dtype=x.dtype)
    wp = (eyeP[:, None, :, None]
          * weight.T.astype(x.dtype)[None, :, None, :]).reshape(P * K, P * N)
    bt_tiled = jnp.tile(bt, P).reshape(1, P * N)

    # --- tile selection (amortize per-step overhead, keep >=2 steps when big)
    R0 = pl.cdiv(B, P)                                   # packed rows needed
    tile_rows = max_tile_rows
    if R0 <= tile_rows:
        tile_rows = max(P, _round_up(R0, P))             # single step
    elif R0 < 2 * tile_rows:
        tile_rows = max(P, _round_up(pl.cdiv(R0, 2), P))  # two steps (megacore)
    R = _round_up(R0, tile_rows)
    B_pad = R * P

    x_pad = x if B_pad == B else jnp.pad(x, ((0, B_pad - B), (0, 0)))
    xp = x_pad.reshape(R, P * K)                         # contiguous, free

    out_p = pl.pallas_call(
        _fused_linear_kernel,
        out_shape=jax.ShapeDtypeStruct((R, P * N), x.dtype),
        grid_spec=pltpu.PrefetchScalarGridSpec(
            num_scalar_prefetch=0,
            grid=(R // tile_rows,),
            in_specs=[
                pl.BlockSpec((tile_rows, P * K), lambda i: (i, 0)),
                pl.BlockSpec((P * K, P * N), lambda i: (0, 0)),
                pl.BlockSpec((1, P * N), lambda i: (0, 0)),
            ],
            out_specs=pl.BlockSpec((tile_rows, P * N), lambda i: (i, 0)),
        ),
        compiler_params=pltpu.CompilerParams(
            dimension_semantics=("parallel",),     # batch tiles are independent
            vmem_limit_bytes=48 * 1024 * 1024,     # headroom under v7x's 64 MiB
        ),
    )(xp, wp, bt_tiled)

    # Packed row r is exactly the row-major flatten of output rows 8r..8r+7,
    # so this reshape is contiguous (free) — no transpose pass.
    out = out_p.reshape(B_pad, N)
    return out[:B] if B_pad != B else out


if __name__ == "__main__":
    key = jax.random.PRNGKey(0)
    k_x, k_w, k_b, k_t, k_x2 = jax.random.split(key, 5)

    K, N = 16, 2
    # Deterministic parameter init (mimics nn.Linear's uniform(-1/sqrt(K), 1/sqrt(K)))
    bound = 1.0 / (K ** 0.5)
    weight = jax.random.uniform(k_w, (N, K), minval=-bound, maxval=bound,
                                dtype=jnp.float32)
    bias = jax.random.uniform(k_b, (N,), minval=-bound, maxval=bound,
                              dtype=jnp.float32)
    t0 = jax.random.normal(k_t, (N,), dtype=jnp.float32)   # torch.randn(2) analogue

    def ref_fn(x):
        return jnp.maximum(x @ weight.T + bias + t0, 0.0)

    # 1) spec-sized tiny batch, forced through the Pallas path
    x_small = jax.random.normal(k_x, (4, K), dtype=jnp.float32)
    out_small = jax.block_until_ready(
        linear_add_relu(x_small, weight, bias, t0, min_pallas_batch=0))
    assert out_small.shape == (4, N)
    assert jnp.allclose(out_small, ref_fn(x_small), atol=1e-5), "small-batch mismatch"

    # 2) ragged batch exercising the multi-step gridded + padded path
    B2 = 2053
    x_big = jax.random.normal(k_x2, (B2, K), dtype=jnp.float32)
    out_big = jax.block_until_ready(
        linear_add_relu(x_big, weight, bias, t0,
                        max_tile_rows=64, min_pallas_batch=0))
    assert out_big.shape == (B2, N)
    assert jnp.allclose(out_big, ref_fn(x_big), atol=1e-5), "gridded-path mismatch"

    # 3) default tiny-batch path (plain fused XLA, per perf feedback)
    out_default = jax.block_until_ready(linear_add_relu(x_small, weight, bias, t0))
    assert jnp.allclose(out_default, ref_fn(x_small), atol=1e-5), "xla-path mismatch"

    print("KERNEL_OK")
</pallas_src>

<mosaic_0001>
module attributes {stable_mosaic.version = 11 : i64} {
  func.func @_fused_linear_kernel(%arg0: i32, %arg1: memref<8x128xf32, #tpu.memory_space<vmem>>, %arg2: memref<128x16xf32, #tpu.memory_space<vmem>>, %arg3: memref<1x16xf32, #tpu.memory_space<vmem>>, %arg4: memref<8x16xf32, #tpu.memory_space<vmem>>) attributes {dimension_semantics = [#tpu.dimension_semantics<parallel>], iteration_bounds = array<i64: 1>, scalar_prefetch = 0 : i64, scratch_operands = 0 : i64, tpu.core_type = #tpu.core_type<tc>, window_params = [{transform_indices = @transform_0, window_bounds = array<i64: 8, 128>}, {pipeline_mode = #tpu.pipeline_mode<synchronous>, transform_indices = @transform_1, window_bounds = array<i64: 128, 16>}, {pipeline_mode = #tpu.pipeline_mode<synchronous>, transform_indices = @transform_2, window_bounds = array<i64: 1, 16>}, {transform_indices = @transform_3, window_bounds = array<i64: 8, 16>}]} {
    %c0 = arith.constant 0 : index
    %c0_0 = arith.constant 0 : index
    %0 = vector.load %arg1[%c0, %c0_0] : memref<8x128xf32, #tpu.memory_space<vmem>>, vector<8x128xf32>
    %c0_1 = arith.constant 0 : index
    %c0_2 = arith.constant 0 : index
    %1 = vector.load %arg2[%c0_1, %c0_2] : memref<128x16xf32, #tpu.memory_space<vmem>>, vector<128x16xf32>
    %cst = arith.constant dense<0.000000e+00> : vector<8x16xf32>
    %2 = tpu.matmul %0, %1, %cst {dimension_numbers = #tpu.dot_dimension_numbers<[1], [0], [0], [1], [0, 0, 1, 1], [], []>} : vector<8x128xf32>, vector<128x16xf32>, vector<8x16xf32> -> vector<8x16xf32>
    %c0_3 = arith.constant 0 : index
    %c0_4 = arith.constant 0 : index
    %3 = vector.load %arg3[%c0_3, %c0_4] : memref<1x16xf32, #tpu.memory_space<vmem>>, vector<1x16xf32>
    %4 = vector.broadcast %3 : vector<1x16xf32> to vector<8x16xf32>
    %5 = arith.addf %2, %4 : vector<8x16xf32>
    %cst_5 = arith.constant 0.000000e+00 : f32
    %6 = vector.broadcast %cst_5 : f32 to vector<8x16xf32>
    %7 = arith.maximumf %5, %6 : vector<8x16xf32>
    %c0_6 = arith.constant 0 : index
    %c0_7 = arith.constant 0 : index
    %8 = vector.load %arg4[%c0_6, %c0_7] : memref<8x16xf32, #tpu.memory_space<vmem>>, vector<8x16xf32>
    tpu.vector_store %arg4[%c0_6, %c0_7], %7 {strides = array<i32>} : memref<8x16xf32, #tpu.memory_space<vmem>>, vector<8x16xf32>,
    return
  }
  func.func @transform_0(%arg0: i32) -> (i32, i32) {
    %c0_i32 = arith.constant 0 : i32
    %c0_i32_0 = arith.constant 0 : i32
    return %arg0, %c0_i32 : i32, i32
  }
  func.func @transform_1(%arg0: i32) -> (i32, i32) {
    %c0_i32 = arith.constant 0 : i32
    %c0_i32_0 = arith.constant 0 : i32
    %c0_i32_1 = arith.constant 0 : i32
    return %c0_i32, %c0_i32_0 : i32, i32
  }
  func.func @transform_2(%arg0: i32) -> (i32, i32) {
    %c0_i32 = arith.constant 0 : i32
    %c0_i32_0 = arith.constant 0 : i32
    %c0_i32_1 = arith.constant 0 : i32
    return %c0_i32, %c0_i32_0 : i32, i32
  }
  func.func @transform_3(%arg0: i32) -> (i32, i32) {
    %c0_i32 = arith.constant 0 : i32
    %c0_i32_0 = arith.constant 0 : i32
    return %arg0, %c0_i32 : i32, i32
  }
}

</mosaic_0001>

<llo_original>
// kernel: tpu_custom_call.1
$region0: #{tpu_custom_call.1}
  #allocation0 [shape = 'u32[]', space=smem, size = 0x4, offset = 0x4, fixed_abs, tag = 'smem constant byte address 0x4 - core index']
  #allocation1 [shape = 'u32[144,128]{1,0:T(1,128)}', space=vmem, size = 0x12000, scoped, tag = 'internal scratch']
  %s0 = inlined_call_operand.vmem [shape: f32[8,128], index: 0, kind: input, shape index: {}]
  %s1 = inlined_call_operand.vmem [shape: f32[128,16], index: 1, kind: input, shape index: {}]
  %s2 = inlined_call_operand.vmem [shape: f32[1,16], index: 2, kind: input, shape index: {}]
  %s3 = inlined_call_operand.hbm [shape: f32[8,16], index: 3, kind: output, shape index: {}]
  %s4 = sld [smem:[#allocation0]]
  $region22: #{tpu_custom_call.1} parent=0
    _
  %s6 = ssub.s32 1, %s4
  %s7 = scalar_select 0, %s6, %s4
  $region1: #{tpu_custom_call.1} parent=0
    #allocation2 [shape = 'u8[4096]{0}', space=vmem, size = 0x1000, scoped, tag = 'output window, operand 0, single buffered']
    #allocation3 [shape = 's32[1]{0}', space=sflag, size = 0x4, scoped, tag = 'scoped memory for tpu_custom_call.1']
    %8 = vsyncpa [#allocation3], 0
    // Predicated region
    $region2: #{tpu_custom_call.1} parent=1 // pred_check
      _
    $region3: #{tpu_custom_call.1} parent=1 // pred_check_branch
      %10 = sbr.rel (0) target = $region5
    $region4: #{tpu_custom_call.1} parent=1 // pred_region
      _
    $region5: #{tpu_custom_call.1} parent=1 // pred_fallthru
      _
    // Predicated region
    $region6: #{tpu_custom_call.1} parent=1 // pred_check
      _
    $region7: #{tpu_custom_call.1} parent=1 // pred_check_branch
      %12 = sbr.rel (0) target = $region9
    $region8: #{tpu_custom_call.1} parent=1 // pred_region
      _
    $region9: #{tpu_custom_call.1} parent=1 // pred_fallthru
      _
    // Predicated region
    $region10: #{tpu_custom_call.1} parent=1 // pred_check
      _
    $region11: #{tpu_custom_call.1} parent=1 // pred_check_branch
      %14 = sbr.rel (0) target = $region13
    $region12: #{tpu_custom_call.1} parent=1 // pred_region
      _
    $region13: #{tpu_custom_call.1} parent=1 // pred_fallthru
      _
    %v15 = vld [vmem:[%s0] sm:$0xff]
    %v16 = vld [vmem:[%s1] sm:$0xff]
    %v17 = vld [vmem:[%s1 + $0x8] sm:$0xff]
    %v18 = vld [vmem:[%s1 + $0x10] sm:$0xff]
    %v19 = vld [vmem:[%s1 + $0x18] sm:$0xff]
    %v20 = vld [vmem:[%s1 + $0x20] sm:$0xff]
    %v21 = vld [vmem:[%s1 + $0x28] sm:$0xff]
    %v22 = vld [vmem:[%s1 + $0x30] sm:$0xff]
    %v23 = vld [vmem:[%s1 + $0x38] sm:$0xff]
    %v24 = vld [vmem:[%s1 + $0x40] sm:$0xff]
    %v25 = vld [vmem:[%s1 + $0x48] sm:$0xff]
    %v26 = vld [vmem:[%s1 + $0x50] sm:$0xff]
    %v27 = vld [vmem:[%s1 + $0x58] sm:$0xff]
    %v28 = vld [vmem:[%s1 + $0x60] sm:$0xff]
    %v29 = vld [vmem:[%s1 + $0x68] sm:$0xff]
    %v30 = vld [vmem:[%s1 + $0x70] sm:$0xff]
    %v31 = vld [vmem:[%s1 + $0x78] sm:$0xff]
    %v32 = vld [vmem:[%s2] sm:$0x1]
    %v34 = vlaneseq
    %v35 = vshrl.u32 %v34, 7
    %v36 = vsub.s32 0, %v35
    %v37 = vrot.slane %v32, %v36
    %39 = vmatprep.subr.mxu0 0.0
    %40 = vmatpush1.msra.mxu0 %v16
    %41 = vmatprep.subr.mxu0 0.0
    %42 = vmatpush1.msra.mxu0 %v17
    %43 = vmatprep.subr.mxu0 0.0
    %44 = vmatpush1.msra.mxu0 %v18
    %45 = vmatprep.subr.mxu0 0.0
    %46 = vmatpush1.msra.mxu0 %v19
    %47 = vmatprep.subr.mxu0 0.0
    %48 = vmatpush1.msra.mxu0 %v20
    %49 = vmatprep.subr.mxu0 0.0
    %50 = vmatpush1.msra.mxu0 %v21
    %51 = vmatprep.subr.mxu0 0.0
    %52 = vmatpush1.msra.mxu0 %v22
    %53 = vmatprep.subr.mxu0 0.0
    %54 = vmatpush1.msra.mxu0 %v23
    %55 = vmatprep.subr.mxu0 0.0
    %56 = vmatpush1.msra.mxu0 %v24
    %57 = vmatprep.subr.mxu0 0.0
    %58 = vmatpush1.msra.mxu0 %v25
    %59 = vmatprep.subr.mxu0 0.0
    %60 = vmatpush1.msra.mxu0 %v26
    %61 = vmatprep.subr.mxu0 0.0
    %62 = vmatpush1.msra.mxu0 %v27
    %63 = vmatprep.subr.mxu0 0.0
    %64 = vmatpush1.msra.mxu0 %v28
    %65 = vmatprep.subr.mxu0 0.0
    %66 = vmatpush1.msra.mxu0 %v29
    %67 = vmatprep.subr.mxu0 0.0
    %68 = vmatpush1.msra.mxu0 %v30
    %69 = vmatprep.subr.mxu0 0.0
    %70 = vmatpush1.msra.mxu0 %v31
    %71 = vmatprep.subr.mxu0 0.0
    %72 = vmatpush1.msra.mxu0 0.0
    %73 = vmatprep.subr.mxu0 0.0
    %74 = vmatpush1.msra.mxu0 0.0
    %75 = vmatprep.subr.mxu0 0.0
    %76 = vmatpush1.msra.mxu0 0.0
    %77 = vmatprep.subr.mxu0 0.0
    %78 = vmatpush1.msra.mxu0 0.0
    %79 = vmatprep.subr.mxu0 0.0
    %80 = vmatpush1.msra.mxu0 0.0
    %81 = vmatprep.subr.mxu0 0.0
    %82 = vmatpush1.msra.mxu0 0.0
    %83 = vmatprep.subr.mxu0 0.0
    %84 = vmatpush1.msra.mxu0 0.0
    %85 = vmatprep.subr.mxu0 0.0
    %86 = vmatpush1.msra.mxu0 0.0
    %87 = vmatprep.subr.mxu0 0.0
    %88 = vmatpush1.msra.mxu0 0.0
    %89 = vmatprep.subr.mxu0 0.0
    %90 = vmatpush1.msra.mxu0 0.0
    %91 = vmatprep.subr.mxu0 0.0
    %92 = vmatpush1.msra.mxu0 0.0
    %93 = vmatprep.subr.mxu0 0.0
    %94 = vmatpush1.msra.mxu0 0.0
    %95 = vmatprep.subr.mxu0 0.0
    %96 = vmatpush1.msra.mxu0 0.0
    %97 = vmatprep.subr.mxu0 0.0
    %98 = vmatpush1.msra.mxu0 0.0
    %99 = vmatprep.subr.mxu0 0.0
    %100 = vmatpush1.msra.mxu0 0.0
    %101 = vmatprep.subr.mxu0 0.0
    %102 = vmatpush1.msra.mxu0 0.0
    %103 = vmatprep.mubr.f32.mxu0 0.0
    %104 = vmatmul.mubr.f32.gmra.mrb[0].mxu0 %v15
    %v105 = vpop.f32.mrb[0].mxu0
    %v106 = vadd.f32 %v37, %v105
    %v107 = vpop.f32.mrb[0].mxu0
    %108 = vdwg.mxu0
    %v109 = vmax.f32 %v106, 0.0
    %vm110 = vcmask 130048
    %111 = vst.msk [vmem:[#allocation2] sm:$0xff] %vm110, %v109
    // Predicated region
    $region14: #{tpu_custom_call.1} parent=1 // pred_check
      _
    $region15: #{tpu_custom_call.1} parent=1 // pred_check_branch
      %113 = sbr.rel (0) target = $region17
    $region16: #{tpu_custom_call.1} parent=1 // pred_region
      %s115 = ssub.s32 128, 128
      %116 = vsyncadd [#allocation3], %s115
      %s118 = sshll.u32 [#allocation2], 4
      %s119 = int_to_ptr.vmem [resolvable:$true] %s118
      %121 = dma.vmem_to_hbm [thread:$0]  %s119, 128, %s3, [#allocation3]
    $region17: #{tpu_custom_call.1} parent=1 // pred_fallthru
      _
    // Predicated region
    $region18: #{tpu_custom_call.1} parent=1 // pred_check
      _
    $region19: #{tpu_custom_call.1} parent=1 // pred_check_branch
      %123 = sbr.rel (0) target = $region21
    $region20: #{tpu_custom_call.1} parent=1 // pred_region
      %124 = dma.done [#allocation3], 128
    $region21: #{tpu_custom_call.1} parent=1 // pred_fallthru
      _
    %125 = vsyncpa [#allocation3], 1

</llo_original>
